<compile_context>
chip_gen: v7x
topology: tpu7x:2x2x1
jax: 0.10.0
libtpu: 0.0.40
codegen_flags: <defaults>
</compile_context>

<pallas_src>
import functools

import jax
import jax.numpy as jnp
from jax.experimental import pallas as pl
from jax.experimental.pallas import tpu as pltpu

F32 = jnp.float32
BF16 = jnp.bfloat16


def _round_up(x, m):
    return ((x + m - 1) // m) * m


# ----------------------------------------------------------------------------
# Kernels
# ----------------------------------------------------------------------------
def _linear_bias_kernel(x_ref, w_ref, b_ref, o_ref):
    """One (tm, tn) output tile, full K in a single step, bias fused."""
    acc = jnp.dot(x_ref[...].astype(BF16), w_ref[...].astype(BF16),
                  preferred_element_type=jnp.float32)
    o_ref[...] = (acc + b_ref[...]).astype(o_ref.dtype)


def _linear_bias_kernel_acc(x_ref, w_ref, b_ref, o_ref, acc_ref):
    """Fallback for K too large for one tile: accumulate over the K grid axis."""
    k = pl.program_id(2)

    @pl.when(k == 0)
    def _init():
        acc_ref[...] = jnp.zeros_like(acc_ref)

    acc_ref[...] += jnp.dot(x_ref[...].astype(BF16), w_ref[...].astype(BF16),
                            preferred_element_type=jnp.float32)

    @pl.when(k == pl.num_programs(2) - 1)
    def _finalize():
        o_ref[...] = (acc_ref[...] + b_ref[...]).astype(o_ref.dtype)


# ----------------------------------------------------------------------------
# Wrapper
# ----------------------------------------------------------------------------
def pallas_linear(x2d, w, b, *, use_core_parallel=False):
    """y = x2d @ w + b.  x2d:(M,K), w:(K,N), b:(N,) -> (M,N) in x2d.dtype."""
    M, K = x2d.shape
    K2, N = w.shape
    assert K == K2 and b.shape == (N,)
    out_dtype = x2d.dtype

    # ---- N tiling -----------------------------------------------------------
    if N <= 256:
        # Single full-width N tile (block dim == full array dim): no padding, no post-slice.
        Np, tn = N, N
        w_p, b_p = w, b
    elif N % 128 == 0:
        Np = N
        tn = 256 if N % 256 == 0 else 128
        w_p, b_p = w, b
    else:
        # Awkward N: pad only the tiny weight/bias; slice the output columns afterwards.
        Np = _round_up(N, 128)
        tn = 128
        w_p = jnp.pad(w, ((0, 0), (0, Np - N)))
        b_p = jnp.pad(b, ((0, Np - N),))
    b2 = b_p.reshape(1, Np).astype(F32)

    # ---- M tiling: no HBM padding; ragged last tile handled by Pallas masking ----
    if M <= 512:
        tm = M                      # single tile (block dim == full array dim)
    elif M <= 8192:
        tm = 512
    else:
        tm = 1024                   # ~4.5 MiB double-buffered: safe on v5e's 16 MiB scoped VMEM
    gm = pl.cdiv(M, tm)
    gn = Np // tn

    # ---- K tiling (K = 512 for this module -> always a single reduction step) ----
    if K <= 2048:
        tk, gk = K, 1
    else:
        tk = 512
        assert K % tk == 0, "ragged K reduction is not supported"
        gk = K // tk

    m_sem = pltpu.CORE_PARALLEL if use_core_parallel else "parallel"

    if gk == 1:
        out = pl.pallas_call(
            _linear_bias_kernel,
            out_shape=jax.ShapeDtypeStruct((M, Np), out_dtype),
            grid_spec=pltpu.PrefetchScalarGridSpec(
                num_scalar_prefetch=0,
                grid=(gm, gn),
                in_specs=[
                    pl.BlockSpec((tm, tk), lambda i, j: (i, 0)),   # activations (streamed once)
                    pl.BlockSpec((tk, tn), lambda i, j: (0, j)),   # weight (resident when gn==1)
                    pl.BlockSpec((1, tn), lambda i, j: (0, j)),    # bias (f32)
                ],
                out_specs=pl.BlockSpec((tm, tn), lambda i, j: (i, j)),
            ),
            compiler_params=pltpu.CompilerParams(
                dimension_semantics=(m_sem, "parallel"),
            ),
        )(x2d, w_p, b2)
    else:
        out = pl.pallas_call(
            _linear_bias_kernel_acc,
            out_shape=jax.ShapeDtypeStruct((M, Np), out_dtype),
            grid_spec=pltpu.PrefetchScalarGridSpec(
                num_scalar_prefetch=0,
                grid=(gm, gn, gk),
                in_specs=[
                    pl.BlockSpec((tm, tk), lambda i, j, k: (i, k)),
                    pl.BlockSpec((tk, tn), lambda i, j, k: (k, j)),
                    pl.BlockSpec((1, tn), lambda i, j, k: (0, j)),
                ],
                out_specs=pl.BlockSpec((tm, tn), lambda i, j, k: (i, j)),
                scratch_shapes=[pltpu.VMEM((tm, tn), jnp.float32)],
            ),
            compiler_params=pltpu.CompilerParams(
                dimension_semantics=(m_sem, "parallel", "arbitrary"),
            ),
        )(x2d, w_p, b2)

    if Np != N:
        out = out[:, :N]
    return out


# ----------------------------------------------------------------------------
# CTC_classifier.forward
# ----------------------------------------------------------------------------
def ctc_classifier_forward(x, w, b, *, min_pallas_rows=256, use_core_parallel=False):
    """x:(B, T, 512) -> (B, T, num_classes); matches nn.Linear over the flattened view.

    w:(512, num_classes) (= PyTorch weight.T), b:(num_classes,).
    """
    B, T, D = x.shape
    x2d = x.reshape(B * T, D)
    if B * T < min_pallas_rows:
        # Tiny M: pallas_call fixed cost dominates -> plain XLA matmul.
        y = x2d @ w + b
    else:
        y = pallas_linear(x2d, w, b, use_core_parallel=use_core_parallel)
    return y.reshape(B, T, -1)


# ----------------------------------------------------------------------------
if __name__ == "__main__":
    D, num_classes = 512, 40

    key = jax.random.PRNGKey(0)
    kx, kw, kb, kx2 = jax.random.split(key, 4)
    bound = 1.0 / (D ** 0.5)  # PyTorch nn.Linear default init range
    w = jax.random.uniform(kw, (D, num_classes), dtype=F32, minval=-bound, maxval=bound)
    b = jax.random.uniform(kb, (num_classes,), dtype=F32, minval=-bound, maxval=bound)

    # Force the Pallas path even at tiny M so the kernel itself is exercised.
    fwd_pallas = jax.jit(functools.partial(ctc_classifier_forward, min_pallas_rows=0))

    # --- Test 1: small shape (B=2, T=8) -> single (16, 512) x tile, single N tile. ---
    B, T = 2, 8
    x = jax.random.normal(kx, (B, T, D), dtype=F32)
    out = jax.block_until_ready(fwd_pallas(x, w, b))
    assert out.shape == (B, T, num_classes), out.shape
    assert bool(jnp.all(jnp.isfinite(out)))
    ref = (x.reshape(-1, D) @ w + b).reshape(B, T, num_classes)
    max_err = float(jnp.max(jnp.abs(out - ref)))
    assert max_err < 1e-1, max_err  # bf16 MXU inputs, f32 accumulation

    # --- Test 2: multi-tile + ragged last M tile (M=1040 -> tm=512, 3 tiles). ---
    B2, T2 = 2, 520
    x2 = jax.random.normal(kx2, (B2, T2, D), dtype=F32)
    out2 = jax.block_until_ready(fwd_pallas(x2, w, b))
    assert out2.shape == (B2, T2, num_classes), out2.shape
    ref2 = (x2.reshape(-1, D) @ w + b).reshape(B2, T2, num_classes)
    max_err2 = float(jnp.max(jnp.abs(out2 - ref2)))
    assert max_err2 < 1e-1, max_err2

    print("KERNEL_OK")
</pallas_src>

<mosaic_0001>
module attributes {stable_mosaic.version = 11 : i64} {
  func.func @_linear_bias_kernel(%arg0: i32, %arg1: i32, %arg2: memref<16x512xf32, #tpu.memory_space<vmem>>, %arg3: memref<512x40xf32, #tpu.memory_space<vmem>>, %arg4: memref<1x40xf32, #tpu.memory_space<vmem>>, %arg5: memref<16x40xf32, #tpu.memory_space<vmem>>) attributes {dimension_semantics = [#tpu.dimension_semantics<parallel>, #tpu.dimension_semantics<parallel>], iteration_bounds = array<i64: 1, 1>, scalar_prefetch = 0 : i64, scratch_operands = 0 : i64, tpu.core_type = #tpu.core_type<tc>, window_params = [{transform_indices = @transform_0, window_bounds = array<i64: 16, 512>}, {transform_indices = @transform_1, window_bounds = array<i64: 512, 40>}, {transform_indices = @transform_2, window_bounds = array<i64: 1, 40>}, {transform_indices = @transform_3, window_bounds = array<i64: 16, 40>}]} {
    %c0 = arith.constant 0 : index
    %c0_0 = arith.constant 0 : index
    %0 = vector.load %arg2[%c0, %c0_0] : memref<16x512xf32, #tpu.memory_space<vmem>>, vector<16x512xf32>
    %1 = arith.truncf %0 : vector<16x512xf32> to vector<16x512xbf16>
    %c0_1 = arith.constant 0 : index
    %c0_2 = arith.constant 0 : index
    %2 = vector.load %arg3[%c0_1, %c0_2] : memref<512x40xf32, #tpu.memory_space<vmem>>, vector<512x40xf32>
    %3 = arith.truncf %2 : vector<512x40xf32> to vector<512x40xbf16>
    %cst = arith.constant dense<0.000000e+00> : vector<16x40xf32>
    %4 = tpu.matmul %1, %3, %cst {dimension_numbers = #tpu.dot_dimension_numbers<[1], [0], [0], [1], [0, 0, 1, 1], [], []>} : vector<16x512xbf16>, vector<512x40xbf16>, vector<16x40xf32> -> vector<16x40xf32>
    %c0_3 = arith.constant 0 : index
    %c0_4 = arith.constant 0 : index
    %5 = vector.load %arg4[%c0_3, %c0_4] : memref<1x40xf32, #tpu.memory_space<vmem>>, vector<1x40xf32>
    %6 = vector.broadcast %5 : vector<1x40xf32> to vector<16x40xf32>
    %7 = arith.addf %4, %6 : vector<16x40xf32>
    %c0_5 = arith.constant 0 : index
    %c0_6 = arith.constant 0 : index
    %8 = vector.load %arg5[%c0_5, %c0_6] : memref<16x40xf32, #tpu.memory_space<vmem>>, vector<16x40xf32>
    tpu.vector_store %arg5[%c0_5, %c0_6], %7 {strides = array<i32>} : memref<16x40xf32, #tpu.memory_space<vmem>>, vector<16x40xf32>,
    return
  }
  func.func @transform_0(%arg0: i32, %arg1: i32) -> (i32, i32) {
    %c0_i32 = arith.constant 0 : i32
    %c0_i32_0 = arith.constant 0 : i32
    return %arg0, %c0_i32 : i32, i32
  }
  func.func @transform_1(%arg0: i32, %arg1: i32) -> (i32, i32) {
    %c0_i32 = arith.constant 0 : i32
    %c0_i32_0 = arith.constant 0 : i32
    return %c0_i32, %arg1 : i32, i32
  }
  func.func @transform_2(%arg0: i32, %arg1: i32) -> (i32, i32) {
    %c0_i32 = arith.constant 0 : i32
    %c0_i32_0 = arith.constant 0 : i32
    return %c0_i32, %arg1 : i32, i32
  }
  func.func @transform_3(%arg0: i32, %arg1: i32) -> (i32, i32) {
    %c0_i32 = arith.constant 0 : i32
    return %arg0, %arg1 : i32, i32
  }
}

</mosaic_0001>

<llo_original>
// kernel: ctc_classifier_forward.1
$region0: #{ctc_classifier_forward.1}
  #allocation0 [shape = 'u32[]', space=smem, size = 0x4, offset = 0x4, fixed_abs, tag = 'smem constant byte address 0x4 - core index']
  #allocation1 [shape = 'u32[144,128]{1,0:T(1,128)}', space=vmem, size = 0x12000, scoped, tag = 'internal scratch']
  %s0 = inlined_call_operand.vmem [shape: f32[16,512], index: 0, kind: input, shape index: {}]
  %s1 = inlined_call_operand.vmem [shape: f32[512,40], index: 1, kind: input, shape index: {}]
  %s2 = inlined_call_operand.vmem [shape: f32[1,40], index: 2, kind: input, shape index: {}]
  %s3 = inlined_call_operand.hbm [shape: f32[16,40], index: 3, kind: output, shape index: {}]
  %s4 = sld [smem:[#allocation0]]
  $region22: #{ctc_classifier_forward.1} parent=0
    _
  %s6 = ssub.s32 1, %s4
  %s7 = scalar_select 0, %s6, %s4
  $region1: #{ctc_classifier_forward.1} parent=0
    #allocation2 [shape = 'u8[8192]{0}', space=vmem, size = 0x2000, scoped, tag = 'output window, operand 0, single buffered']
    #allocation3 [shape = 's32[1]{0}', space=sflag, size = 0x4, scoped, tag = 'scoped memory for ctc_classifier_forward.1']
    %8 = vsyncpa [#allocation3], 0
    // Predicated region
    $region2: #{ctc_classifier_forward.1} parent=1 // pred_check
      _
    $region3: #{ctc_classifier_forward.1} parent=1 // pred_check_branch
      %10 = sbr.rel (0) target = $region5
    $region4: #{ctc_classifier_forward.1} parent=1 // pred_region
      _
    $region5: #{ctc_classifier_forward.1} parent=1 // pred_fallthru
      _
    // Predicated region
    $region6: #{ctc_classifier_forward.1} parent=1 // pred_check
      _
    $region7: #{ctc_classifier_forward.1} parent=1 // pred_check_branch
      %12 = sbr.rel (0) target = $region9
    $region8: #{ctc_classifier_forward.1} parent=1 // pred_region
      _
    $region9: #{ctc_classifier_forward.1} parent=1 // pred_fallthru
      _
    // Predicated region
    $region10: #{ctc_classifier_forward.1} parent=1 // pred_check
      _
    $region11: #{ctc_classifier_forward.1} parent=1 // pred_check_branch
      %14 = sbr.rel (0) target = $region13
    $region12: #{ctc_classifier_forward.1} parent=1 // pred_region
      _
    $region13: #{ctc_classifier_forward.1} parent=1 // pred_fallthru
      _
    %v16 = vld [vmem:[%s0] sm:$0xff]
    %v17 = vld [vmem:[%s0 + $0x8] sm:$0xff]
    %v18 = vld [vmem:[%s0 + $0x10] sm:$0xff]
    %v19 = vld [vmem:[%s0 + $0x18] sm:$0xff]
    %v20 = vld [vmem:[%s0 + $0x20] sm:$0xff]
    %v21 = vld [vmem:[%s0 + $0x28] sm:$0xff]
    %v22 = vld [vmem:[%s0 + $0x30] sm:$0xff]
    %v23 = vld [vmem:[%s0 + $0x38] sm:$0xff]
    %v24 = vpack.c.bf16 %v20, %v16
    %v25 = vpack.c.bf16 %v21, %v17
    %v26 = vpack.c.bf16 %v22, %v18
    %v27 = vpack.c.bf16 %v23, %v19
    %v28 = vld [vmem:[%s1] sm:$0xff]
    %v29 = vld [vmem:[%s1 + $0x8] sm:$0xff]
    %v30 = vld [vmem:[%s1 + $0x10] sm:$0xff]
    %v31 = vld [vmem:[%s1 + $0x18] sm:$0xff]
    %v32 = vld [vmem:[%s1 + $0x20] sm:$0xff]
    %v33 = vld [vmem:[%s1 + $0x28] sm:$0xff]
    %v34 = vld [vmem:[%s1 + $0x30] sm:$0xff]
    %v35 = vld [vmem:[%s1 + $0x38] sm:$0xff]
    %v36 = vld [vmem:[%s1 + $0x40] sm:$0xff]
    %v37 = vld [vmem:[%s1 + $0x48] sm:$0xff]
    %v38 = vld [vmem:[%s1 + $0x50] sm:$0xff]
    %v39 = vld [vmem:[%s1 + $0x58] sm:$0xff]
    %v40 = vld [vmem:[%s1 + $0x60] sm:$0xff]
    %v41 = vld [vmem:[%s1 + $0x68] sm:$0xff]
    %v42 = vld [vmem:[%s1 + $0x70] sm:$0xff]
    %v43 = vld [vmem:[%s1 + $0x78] sm:$0xff]
    %v44 = vld [vmem:[%s1 + $0x80] sm:$0xff]
    %v45 = vld [vmem:[%s1 + $0x88] sm:$0xff]
    %v46 = vld [vmem:[%s1 + $0x90] sm:$0xff]
    %v47 = vld [vmem:[%s1 + $0x98] sm:$0xff]
    %v48 = vld [vmem:[%s1 + $0xa0] sm:$0xff]
    %v49 = vld [vmem:[%s1 + $0xa8] sm:$0xff]
    %v50 = vld [vmem:[%s1 + $0xb0] sm:$0xff]
    %v51 = vld [vmem:[%s1 + $0xb8] sm:$0xff]
    %v52 = vld [vmem:[%s1 + $0xc0] sm:$0xff]
    %v53 = vld [vmem:[%s1 + $0xc8] sm:$0xff]
    %v54 = vld [vmem:[%s1 + $0xd0] sm:$0xff]
    %v55 = vld [vmem:[%s1 + $0xd8] sm:$0xff]
    %v56 = vld [vmem:[%s1 + $0xe0] sm:$0xff]
    %v57 = vld [vmem:[%s1 + $0xe8] sm:$0xff]
    %v58 = vld [vmem:[%s1 + $0xf0] sm:$0xff]
    %v59 = vld [vmem:[%s1 + $0xf8] sm:$0xff]
    %v60 = vld [vmem:[%s1 + $0x100] sm:$0xff]
    %v61 = vld [vmem:[%s1 + $0x108] sm:$0xff]
    %v62 = vld [vmem:[%s1 + $0x110] sm:$0xff]
    %v63 = vld [vmem:[%s1 + $0x118] sm:$0xff]
    %v64 = vld [vmem:[%s1 + $0x120] sm:$0xff]
    %v65 = vld [vmem:[%s1 + $0x128] sm:$0xff]
    %v66 = vld [vmem:[%s1 + $0x130] sm:$0xff]
    %v67 = vld [vmem:[%s1 + $0x138] sm:$0xff]
    %v68 = vld [vmem:[%s1 + $0x140] sm:$0xff]
    %v69 = vld [vmem:[%s1 + $0x148] sm:$0xff]
    %v70 = vld [vmem:[%s1 + $0x150] sm:$0xff]
    %v71 = vld [vmem:[%s1 + $0x158] sm:$0xff]
    %v72 = vld [vmem:[%s1 + $0x160] sm:$0xff]
    %v73 = vld [vmem:[%s1 + $0x168] sm:$0xff]
    %v74 = vld [vmem:[%s1 + $0x170] sm:$0xff]
    %v75 = vld [vmem:[%s1 + $0x178] sm:$0xff]
    %v76 = vld [vmem:[%s1 + $0x180] sm:$0xff]
    %v77 = vld [vmem:[%s1 + $0x188] sm:$0xff]
    %v78 = vld [vmem:[%s1 + $0x190] sm:$0xff]
    %v79 = vld [vmem:[%s1 + $0x198] sm:$0xff]
    %v80 = vld [vmem:[%s1 + $0x1a0] sm:$0xff]
    %v81 = vld [vmem:[%s1 + $0x1a8] sm:$0xff]
    %v82 = vld [vmem:[%s1 + $0x1b0] sm:$0xff]
    %v83 = vld [vmem:[%s1 + $0x1b8] sm:$0xff]
    %v84 = vld [vmem:[%s1 + $0x1c0] sm:$0xff]
    %v85 = vld [vmem:[%s1 + $0x1c8] sm:$0xff]
    %v86 = vld [vmem:[%s1 + $0x1d0] sm:$0xff]
    %v87 = vld [vmem:[%s1 + $0x1d8] sm:$0xff]
    %v88 = vld [vmem:[%s1 + $0x1e0] sm:$0xff]
    %v89 = vld [vmem:[%s1 + $0x1e8] sm:$0xff]
    %v90 = vld [vmem:[%s1 + $0x1f0] sm:$0xff]
    %v91 = vld [vmem:[%s1 + $0x1f8] sm:$0xff]
    %v92 = vpack.c.bf16 %v29, %v28
    %v93 = vpack.c.bf16 %v31, %v30
    %v94 = vpack.c.bf16 %v33, %v32
    %v95 = vpack.c.bf16 %v35, %v34
    %v96 = vpack.c.bf16 %v37, %v36
    %v97 = vpack.c.bf16 %v39, %v38
    %v98 = vpack.c.bf16 %v41, %v40
    %v99 = vpack.c.bf16 %v43, %v42
    %v100 = vpack.c.bf16 %v45, %v44
    %v101 = vpack.c.bf16 %v47, %v46
    %v102 = vpack.c.bf16 %v49, %v48
    %v103 = vpack.c.bf16 %v51, %v50
    %v104 = vpack.c.bf16 %v53, %v52
    %v105 = vpack.c.bf16 %v55, %v54
    %v106 = vpack.c.bf16 %v57, %v56
    %v107 = vpack.c.bf16 %v59, %v58
    %v108 = vpack.c.bf16 %v61, %v60
    %v109 = vpack.c.bf16 %v63, %v62
    %v110 = vpack.c.bf16 %v65, %v64
    %v111 = vpack.c.bf16 %v67, %v66
    %v112 = vpack.c.bf16 %v69, %v68
    %v113 = vpack.c.bf16 %v71, %v70
    %v114 = vpack.c.bf16 %v73, %v72
    %v115 = vpack.c.bf16 %v75, %v74
    %v116 = vpack.c.bf16 %v77, %v76
    %v117 = vpack.c.bf16 %v79, %v78
    %v118 = vpack.c.bf16 %v81, %v80
    %v119 = vpack.c.bf16 %v83, %v82
    %v120 = vpack.c.bf16 %v85, %v84
    %v121 = vpack.c.bf16 %v87, %v86
    %v122 = vpack.c.bf16 %v89, %v88
    %v123 = vpack.c.bf16 %v91, %v90
    %v124 = vld [vmem:[%s2] sm:$0x1]
    %v126 = vlaneseq
    %v127 = vshrl.u32 %v126, 7
    %v128 = vsub.s32 0, %v127
    %v129 = vrot.slane %v124, %v128
    %131 = vmatprep.subr.bf16.mxu0 0
    %132 = vmatpush1.bf16.msra.mxu0 %v92
    %133 = vmatprep.subr.bf16.mxu0 0
    %134 = vmatpush1.bf16.msra.mxu0 %v93
    %135 = vmatprep.subr.bf16.mxu0 0
    %136 = vmatpush1.bf16.msra.mxu0 %v94
    %137 = vmatprep.subr.bf16.mxu0 0
    %138 = vmatpush1.bf16.msra.mxu0 %v95
    %139 = vmatprep.subr.bf16.mxu0 0
    %140 = vmatpush1.bf16.msra.mxu0 %v96
    %141 = vmatprep.subr.bf16.mxu0 0
    %142 = vmatpush1.bf16.msra.mxu0 %v97
    %143 = vmatprep.subr.bf16.mxu0 0
    %144 = vmatpush1.bf16.msra.mxu0 %v98
    %145 = vmatprep.subr.bf16.mxu0 0
    %146 = vmatpush1.bf16.msra.mxu0 %v99
    %147 = vmatprep.subr.bf16.mxu0 0
    %148 = vmatpush1.bf16.msra.mxu0 %v100
    %149 = vmatprep.subr.bf16.mxu0 0
    %150 = vmatpush1.bf16.msra.mxu0 %v101
    %151 = vmatprep.subr.bf16.mxu0 0
    %152 = vmatpush1.bf16.msra.mxu0 %v102
    %153 = vmatprep.subr.bf16.mxu0 0
    %154 = vmatpush1.bf16.msra.mxu0 %v103
    %155 = vmatprep.subr.bf16.mxu0 0
    %156 = vmatpush1.bf16.msra.mxu0 %v104
    %157 = vmatprep.subr.bf16.mxu0 0
    %158 = vmatpush1.bf16.msra.mxu0 %v105
    %159 = vmatprep.subr.bf16.mxu0 0
    %160 = vmatpush1.bf16.msra.mxu0 %v106
    %161 = vmatprep.subr.bf16.mxu0 0
    %162 = vmatpush1.bf16.msra.mxu0 %v107
    %163 = vmatprep.mubr.bf16.mxu0 %v25
    %164 = vmatmul.mubr.bf16.gmra.mrb[0].mxu0 %v24
    %v165 = vpop.f32.mrb[0].mxu0
    %v166 = vadd.f32 %v129, %v165
    %v167 = vpop.f32.mrb[0].mxu0
    %v168 = vpop.f32.mrb[0].mxu0
    %v169 = vadd.f32 %v129, %v168
    %v170 = vpop.f32.mrb[0].mxu0
    %171 = vdwg.mxu0
    %172 = vmatprep.subr.bf16.mxu0 0
    %173 = vmatpush1.bf16.msra.mxu0 %v108
    %174 = vmatprep.subr.bf16.mxu0 0
    %175 = vmatpush1.bf16.msra.mxu0 %v109
    %176 = vmatprep.subr.bf16.mxu0 0
    %177 = vmatpush1.bf16.msra.mxu0 %v110
    %178 = vmatprep.subr.bf16.mxu0 0
    %179 = vmatpush1.bf16.msra.mxu0 %v111
    %180 = vmatprep.subr.bf16.mxu0 0
    %181 = vmatpush1.bf16.msra.mxu0 %v112
    %182 = vmatprep.subr.bf16.mxu0 0
    %183 = vmatpush1.bf16.msra.mxu0 %v113
    %184 = vmatprep.subr.bf16.mxu0 0
    %185 = vmatpush1.bf16.msra.mxu0 %v114
    %186 = vmatprep.subr.bf16.mxu0 0
    %187 = vmatpush1.bf16.msra.mxu0 %v115
    %188 = vmatprep.subr.bf16.mxu0 0
    %189 = vmatpush1.bf16.msra.mxu0 %v116
    %190 = vmatprep.subr.bf16.mxu0 0
    %191 = vmatpush1.bf16.msra.mxu0 %v117
    %192 = vmatprep.subr.bf16.mxu0 0
    %193 = vmatpush1.bf16.msra.mxu0 %v118
    %194 = vmatprep.subr.bf16.mxu0 0
    %195 = vmatpush1.bf16.msra.mxu0 %v119
    %196 = vmatprep.subr.bf16.mxu0 0
    %197 = vmatpush1.bf16.msra.mxu0 %v120
    %198 = vmatprep.subr.bf16.mxu0 0
    %199 = vmatpush1.bf16.msra.mxu0 %v121
    %200 = vmatprep.subr.bf16.mxu0 0
    %201 = vmatpush1.bf16.msra.mxu0 %v122
    %202 = vmatprep.subr.bf16.mxu0 0
    %203 = vmatpush1.bf16.msra.mxu0 %v123
    %204 = vmatprep.mubr.bf16.mxu0 %v27
    %205 = vmatmul.mubr.bf16.gmra.mrb[0].mxu0 %v26
    %v206 = vpop.f32.mrb[0].mxu0
    %v207 = vadd.f32 %v166, %v206
    %v208 = vpop.f32.mrb[0].mxu0
    %v209 = vpop.f32.mrb[0].mxu0
    %v210 = vadd.f32 %v169, %v209
    %v211 = vpop.f32.mrb[0].mxu0
    %212 = vdwg.mxu0
    %vm213 = vcmask 326656
    %214 = vst.msk [vmem:[#allocation2] sm:$0xff] %vm213, %v207
    %215 = vst.msk [vmem:[#allocation2 + $0x8] sm:$0xff] %vm213, %v210
    // Predicated region
    $region14: #{ctc_classifier_forward.1} parent=1 // pred_check
      _
    $region15: #{ctc_classifier_forward.1} parent=1 // pred_check_branch
      %217 = sbr.rel (0) target = $region17
    $region16: #{ctc_classifier_forward.1} parent=1 // pred_region
      %s219 = ssub.s32 256, 256
      %220 = vsyncadd [#allocation3], %s219
      %s221 = sshll.u32 [#allocation2], 4
      %s222 = int_to_ptr.vmem [resolvable:$true] %s221
      %227 = dma.vmem_to_hbm [thread:$0]  %s222, 256, %s3, [#allocation3], 128, 128, 8
    $region17: #{ctc_classifier_forward.1} parent=1 // pred_fallthru
      _
    // Predicated region
    $region18: #{ctc_classifier_forward.1} parent=1 // pred_check
      _
    $region19: #{ctc_classifier_forward.1} parent=1 // pred_check_branch
      %229 = sbr.rel (0) target = $region21
    $region20: #{ctc_classifier_forward.1} parent=1 // pred_region
      %230 = dma.done [#allocation3], 256
    $region21: #{ctc_classifier_forward.1} parent=1 // pred_fallthru
      _
    %231 = vsyncpa [#allocation3], 1

</llo_original>
